<compile_context>
chip_gen: v6e
topology: v6e:2x2x1
jax: 0.10.0
libtpu: 0.0.40
codegen_flags: <defaults>
</compile_context>

<pallas_src>
import functools

import jax
import jax.numpy as jnp
from jax.experimental import pallas as pl
from jax.experimental.pallas import tpu as pltpu

_MIB = 1024 * 1024


def _scoped_vmem_budget():
    """Generation-aware scoped-VMEM budget (bytes) for the pallas_call."""
    try:
        cap = pltpu.get_tpu_info().vmem_capacity_bytes
    except Exception:
        cap = 64 * _MIB  # be conservative (v7x has 64 MiB per TensorCore)
    # Leave headroom for compiler scratch: ~100 MiB on 128 MiB parts (v5e/v6e),
    # ~48 MiB on v7x.
    return int(min(cap - 16 * _MIB, 100 * _MIB))


def _pick_tiles(N, Cin, Cout, H, W, itemsize, vmem_budget):
    """Choose (th, Nb): th input rows and Nb batch images per grid step."""
    weight_bytes = Cout * Cin * itemsize

    def vmem_need(th, nb):
        x_tile = Cin * th * W * itemsize
        o_tile = Cout * th * W * itemsize
        tmp = 3 * Cout * th * W * 4          # f32 matmul result + relayout temps
        return nb * 2 * (x_tile + o_tile) + tmp + weight_bytes

    budget = vmem_budget // 2                # slack for double-buffer skew

    # Admissible row tiles: divisors of H giving lane-dense x blocks
    # (th*W % 128 == 0) and sublane-aligned output blocks (th % 8 == 0), or the
    # always-legal full extent th == H.
    divisors = [d for d in range(1, H + 1) if H % d == 0]
    lane_ok = [d for d in divisors
               if ((d * W) % 128 == 0 and d % 8 == 0) or d == H]
    if not lane_ok:
        lane_ok = [H]
    # TODO(synk): for pathological H/W, zero-pad H*W to a multiple of 128 instead
    # of falling back to a single full-extent block (keeps pipelining).

    fitting = [d for d in lane_ok if vmem_need(d, 1) <= budget and d * W <= 16384]
    if not fitting:
        fitting = [min(lane_ok)]
    # Keep >= 2 grid steps when there is no batch parallelism, so both of v7x's
    # two TensorCores get work.
    if N == 1:
        multi = [d for d in fitting if H // d >= 2]
        fitting = multi or fitting
    th = max(fitting)

    # Tiny spatial extents: block several batch images per step to amortize the
    # ~0.35us/step grid overhead, but keep >= 2 grid steps for v7x megacore.
    Nb = 1
    if th == H and th * W < 2048 and N > 1:
        for nb in sorted((d for d in range(2, N + 1) if N % d == 0), reverse=True):
            if N // nb >= 2 and vmem_need(th, nb) <= budget:
                Nb = nb
                break
    return th, Nb


def _dups_fused_kernel(x_ref, w_ref, o_ref, *, K, s, th, W, Nb):
    """1x1 conv + fused DUpsampling pixel-shuffle for one (batch, row-block) tile.

    x_ref : (Nb, Cin, th*W)      activation tile, spatial flattened (NCHW view)
    w_ref : (Cout, Cin)          whole weight, rows pre-ordered (k, p, q)
    o_ref : (Nb, K, th, s*W*s)   output tile, already in the final memory order
    """
    for b in range(Nb):                                   # static unroll, Nb tiny
        y = jnp.dot(w_ref[...], x_ref[b],
                    preferred_element_type=jnp.float32)   # (K*s*s, th*W)
        # rows are (k, p, q); lanes are (h, w)
        y = y.reshape(K, s, s, th, W)                     # (k, p, q, h, w)
        # Final NCHW order needs out[k, h*s+p, w*s+q]; within the tile that is
        # the contiguous order (k, h, p, w, q).
        y = jnp.transpose(y, (0, 3, 1, 4, 2))             # (k, h, p, w, q)
        o_ref[b] = y.reshape(K, th, s * W * s).astype(o_ref.dtype)


def _conv1x1_kernel(x_ref, w_ref, o_ref, *, Nb):
    """Fallback: plain 1x1-conv tile (pixel shuffle done by XLA in the wrapper)."""
    for b in range(Nb):
        o_ref[b] = jnp.dot(w_ref[...], x_ref[b],
                           preferred_element_type=jnp.float32).astype(o_ref.dtype)


def _dupsampling_fused(x, weight, scale, num_class):
    N, Cin, H, W = x.shape
    s, K = scale, num_class
    Cout = K * s * s
    assert weight.shape == (Cout, Cin)

    itemsize = jnp.dtype(x.dtype).itemsize
    vmem_limit = _scoped_vmem_budget()
    th, Nb = _pick_tiles(N, Cin, Cout, H, W, itemsize, vmem_limit)
    L = s * W * s

    # Reorder weight rows from the PyTorch (q, p, k) nesting to (k, p, q) so the
    # in-kernel rearrangement is one fixed permutation.  Tiny one-off transform
    # (would be folded into the parameters in a real model).
    w_perm = jnp.transpose(weight.reshape(s, s, K, Cin), (2, 1, 0, 3))
    w_perm = w_perm.reshape(Cout, Cin)

    x_flat = x.reshape(N, Cin, H * W)          # pure view of NCHW, no data movement

    cost = pl.CostEstimate(
        flops=2 * N * H * W * Cin * Cout,
        transcendentals=0,
        bytes_accessed=itemsize * (N * H * W * (Cin + Cout) + Cout * Cin),
    )

    out4 = pl.pallas_call(
        functools.partial(_dups_fused_kernel, K=K, s=s, th=th, W=W, Nb=Nb),
        out_shape=jax.ShapeDtypeStruct((N, K, H, L), x.dtype),
        grid=(N // Nb, H // th),
        in_specs=[
            pl.BlockSpec((Nb, Cin, th * W), lambda n, h: (n, 0, h)),
            # Grid-invariant weight: whole array resident in VMEM (no per-step DMA).
            pl.BlockSpec(memory_space=pltpu.MemorySpace.VMEM),
        ],
        out_specs=pl.BlockSpec((Nb, K, th, L), lambda n, h: (n, 0, h, 0)),
        compiler_params=pltpu.CompilerParams(
            dimension_semantics=("parallel", "parallel"),
            vmem_limit_bytes=vmem_limit,
        ),
        cost_estimate=cost,
    )(x_flat, w_perm)

    # (N, K, H, s*W*s) is already the final memory order of NCHW output:
    # merging (H, s*W*s) -> (H*s, W*s) is a free contiguous reshape.
    return out4.reshape(N, K, H * s, W * s)


def _dupsampling_unfused(x, weight, scale, num_class):
    """Fallback path: matmul-only kernel + XLA-side collapsed pixel shuffle."""
    N, Cin, H, W = x.shape
    s, K = scale, num_class
    Cout = K * s * s

    itemsize = jnp.dtype(x.dtype).itemsize
    vmem_limit = _scoped_vmem_budget()
    th, Nb = _pick_tiles(N, Cin, Cout, H, W, itemsize, vmem_limit)

    x_flat = x.reshape(N, Cin, H * W)
    cost = pl.CostEstimate(
        flops=2 * N * H * W * Cin * Cout,
        transcendentals=0,
        bytes_accessed=itemsize * (N * H * W * (Cin + Cout) + Cout * Cin),
    )
    y = pl.pallas_call(
        functools.partial(_conv1x1_kernel, Nb=Nb),
        out_shape=jax.ShapeDtypeStruct((N, Cout, H * W), x.dtype),
        grid=(N // Nb, H // th),
        in_specs=[
            pl.BlockSpec((Nb, Cin, th * W), lambda n, h: (n, 0, h)),
            pl.BlockSpec(memory_space=pltpu.MemorySpace.VMEM),
        ],
        out_specs=pl.BlockSpec((Nb, Cout, th * W), lambda n, h: (n, 0, h)),
        compiler_params=pltpu.CompilerParams(
            dimension_semantics=("parallel", "parallel"),
            vmem_limit_bytes=vmem_limit,
        ),
        cost_estimate=cost,
    )(x_flat, weight)

    # Collapsed DUpsampling permute/view chain (single fused 6-D transpose):
    #   out[n, k, h*s + p, w*s + q] = y[n, (q*s + p)*K + k, h, w]
    y6 = y.reshape(N, s, s, K, H, W)               # (n, q, p, k, h, w)
    out6 = jnp.transpose(y6, (0, 3, 4, 2, 5, 1))   # (n, k, h, p, w, q)
    return out6.reshape(N, K, H * s, W * s)


def dupsampling_forward(x, weight, scale, num_class):
    """Mirror of DUpsampling.forward: (N, Cin, H, W) -> (N, K, H*scale, W*scale)."""
    try:
        out = _dupsampling_fused(x, weight, scale, num_class)
        return jax.block_until_ready(out)
    except Exception:
        # If Mosaic on this jax version cannot lower the fused in-VMEM relayout
        # (rank-5 transpose / lane-split reshape), fall back to the matmul-only
        # kernel + XLA pixel shuffle (one extra HBM round trip, still correct).
        out = _dupsampling_unfused(x, weight, scale, num_class)
        return jax.block_until_ready(out)


if __name__ == "__main__":
    # Small deterministic problem: N=2, inplanes=32, H=W=16, scale=2, num_class=16.
    N, Cin, H, W = 2, 32, 16, 16
    scale, num_class = 2, 16
    Cout = num_class * scale * scale   # 64

    key = jax.random.PRNGKey(0)
    kx, kw = jax.random.split(key)
    x = jax.random.normal(kx, (N, Cin, H, W), dtype=jnp.float32)
    # nn.Conv2d weight is (Cout, Cin, 1, 1); keep it squeezed to (Cout, Cin).
    weight = jax.random.normal(kw, (Cout, Cin), dtype=jnp.float32) * 0.05

    out = dupsampling_forward(x, weight, scale, num_class)
    out = jax.block_until_ready(out)

    # Reference: literal transcription of the PyTorch forward (pure XLA).
    y_ref = jnp.einsum("nchw,oc->nohw", x, weight)            # 1x1 conv, NCHW
    y_ref = jnp.transpose(y_ref, (0, 2, 3, 1))
    y_ref = y_ref.reshape(N, H, W * scale, Cout // scale)
    y_ref = jnp.transpose(y_ref, (0, 2, 1, 3))
    y_ref = y_ref.reshape(N, W * scale, H * scale, num_class)
    y_ref = jnp.transpose(y_ref, (0, 3, 2, 1))

    assert out.shape == (N, num_class, H * scale, W * scale), out.shape
    assert jnp.allclose(out, y_ref, atol=1e-4, rtol=1e-4)
    print("KERNEL_OK")
</pallas_src>

<mosaic_0001>
module attributes {stable_mosaic.version = 11 : i64} {
  func.func @_dups_fused_kernel(%arg0: i32, %arg1: i32, %arg2: memref<1x32x256xf32, #tpu.memory_space<vmem>>, %arg3: memref<64x32xf32, #tpu.memory_space<vmem>>, %arg4: memref<1x16x16x64xf32, #tpu.memory_space<vmem>>) attributes {dimension_semantics = [#tpu.dimension_semantics<parallel>, #tpu.dimension_semantics<parallel>], iteration_bounds = array<i64: 2, 1>, scalar_prefetch = 0 : i64, scratch_operands = 0 : i64, tpu.core_type = #tpu.core_type<tc>, window_params = [{transform_indices = @transform_0, window_bounds = array<i64: 1, 32, 256>}, {pipeline_mode = #tpu.pipeline_mode<synchronous>, transform_indices = @transform_1, window_bounds = array<i64: 64, 32>}, {transform_indices = @transform_2, window_bounds = array<i64: 1, 16, 16, 64>}]} {
    %c0 = arith.constant 0 : index
    %c0_0 = arith.constant 0 : index
    %0 = vector.load %arg3[%c0, %c0_0] : memref<64x32xf32, #tpu.memory_space<vmem>>, vector<64x32xf32>
    %c0_1 = arith.constant 0 : index
    %c0_2 = arith.constant 0 : index
    %c0_3 = arith.constant 0 : index
    %1 = vector.load %arg2[%c0_1, %c0_2, %c0_3] : memref<1x32x256xf32, #tpu.memory_space<vmem>>, vector<1x32x256xf32>
    %2 = vector.shape_cast %1 : vector<1x32x256xf32> to vector<32x256xf32>
    %cst = arith.constant dense<0.000000e+00> : vector<64x256xf32>
    %3 = tpu.matmul %0, %2, %cst {dimension_numbers = #tpu.dot_dimension_numbers<[1], [0], [0], [1], [0, 0, 1, 1], [], []>} : vector<64x32xf32>, vector<32x256xf32>, vector<64x256xf32> -> vector<64x256xf32>
    %4 = vector.shape_cast %3 : vector<64x256xf32> to vector<16x2x2x16x16xf32>
    %5 = tpu.transpose %4, [0, 3, 1, 4, 2] : vector<16x2x2x16x16xf32> -> vector<16x16x2x16x2xf32>
    %6 = vector.shape_cast %5 : vector<16x16x2x16x2xf32> to vector<16x16x64xf32>
    %c0_4 = arith.constant 0 : index
    %c0_5 = arith.constant 0 : index
    %c0_6 = arith.constant 0 : index
    %c0_7 = arith.constant 0 : index
    %7 = vector.load %arg4[%c0_4, %c0_5, %c0_6, %c0_7] : memref<1x16x16x64xf32, #tpu.memory_space<vmem>>, vector<1x16x16x64xf32>
    %8 = vector.shape_cast %7 : vector<1x16x16x64xf32> to vector<16x16x64xf32>
    %9 = vector.shape_cast %6 : vector<16x16x64xf32> to vector<1x16x16x64xf32>
    tpu.vector_store %arg4[%c0_4, %c0_5, %c0_6, %c0_7], %9 {strides = array<i32>} : memref<1x16x16x64xf32, #tpu.memory_space<vmem>>, vector<1x16x16x64xf32>,
    return
  }
  func.func @transform_0(%arg0: i32, %arg1: i32) -> (i32, i32, i32) {
    %c0_i32 = arith.constant 0 : i32
    %c0_i32_0 = arith.constant 0 : i32
    return %arg0, %c0_i32, %arg1 : i32, i32, i32
  }
  func.func @transform_1(%arg0: i32, %arg1: i32) -> (i32, i32) {
    %c0_i32 = arith.constant 0 : i32
    %c0_i32_0 = arith.constant 0 : i32
    %c0_i32_1 = arith.constant 0 : i32
    return %c0_i32, %c0_i32_0 : i32, i32
  }
  func.func @transform_2(%arg0: i32, %arg1: i32) -> (i32, i32, i32, i32) {
    %c0_i32 = arith.constant 0 : i32
    %c0_i32_0 = arith.constant 0 : i32
    %c0_i32_1 = arith.constant 0 : i32
    return %arg0, %c0_i32, %arg1, %c0_i32_0 : i32, i32, i32, i32
  }
}

module attributes {stable_mosaic.version = 11 : i64} {
  func.func @_conv1x1_kernel(%arg0: i32, %arg1: i32, %arg2: memref<1x32x256xf32, #tpu.memory_space<vmem>>, %arg3: memref<64x32xf32, #tpu.memory_space<vmem>>, %arg4: memref<1x64x256xf32, #tpu.memory_space<vmem>>) attributes {dimension_semantics = [#tpu.dimension_semantics<parallel>, #tpu.dimension_semantics<parallel>], iteration_bounds = array<i64: 2, 1>, scalar_prefetch = 0 : i64, scratch_operands = 0 : i64, tpu.core_type = #tpu.core_type<tc>, window_params = [{transform_indices = @transform_0, window_bounds = array<i64: 1, 32, 256>}, {pipeline_mode = #tpu.pipeline_mode<synchronous>, transform_indices = @transform_1, window_bounds = array<i64: 64, 32>}, {transform_indices = @transform_2, window_bounds = array<i64: 1, 64, 256>}]} {
    %c0 = arith.constant 0 : index
    %c0_0 = arith.constant 0 : index
    %0 = vector.load %arg3[%c0, %c0_0] : memref<64x32xf32, #tpu.memory_space<vmem>>, vector<64x32xf32>
    %c0_1 = arith.constant 0 : index
    %c0_2 = arith.constant 0 : index
    %c0_3 = arith.constant 0 : index
    %1 = vector.load %arg2[%c0_1, %c0_2, %c0_3] : memref<1x32x256xf32, #tpu.memory_space<vmem>>, vector<1x32x256xf32>
    %2 = vector.shape_cast %1 : vector<1x32x256xf32> to vector<32x256xf32>
    %cst = arith.constant dense<0.000000e+00> : vector<64x256xf32>
    %3 = tpu.matmul %0, %2, %cst {dimension_numbers = #tpu.dot_dimension_numbers<[1], [0], [0], [1], [0, 0, 1, 1], [], []>} : vector<64x32xf32>, vector<32x256xf32>, vector<64x256xf32> -> vector<64x256xf32>
    %c0_4 = arith.constant 0 : index
    %c0_5 = arith.constant 0 : index
    %c0_6 = arith.constant 0 : index
    %4 = vector.load %arg4[%c0_4, %c0_5, %c0_6] : memref<1x64x256xf32, #tpu.memory_space<vmem>>, vector<1x64x256xf32>
    %5 = vector.shape_cast %4 : vector<1x64x256xf32> to vector<64x256xf32>
    %6 = vector.shape_cast %3 : vector<64x256xf32> to vector<1x64x256xf32>
    tpu.vector_store %arg4[%c0_4, %c0_5, %c0_6], %6 {strides = array<i32>} : memref<1x64x256xf32, #tpu.memory_space<vmem>>, vector<1x64x256xf32>,
    return
  }
  func.func @transform_0(%arg0: i32, %arg1: i32) -> (i32, i32, i32) {
    %c0_i32 = arith.constant 0 : i32
    %c0_i32_0 = arith.constant 0 : i32
    return %arg0, %c0_i32, %arg1 : i32, i32, i32
  }
  func.func @transform_1(%arg0: i32, %arg1: i32) -> (i32, i32) {
    %c0_i32 = arith.constant 0 : i32
    %c0_i32_0 = arith.constant 0 : i32
    %c0_i32_1 = arith.constant 0 : i32
    return %c0_i32, %c0_i32_0 : i32, i32
  }
  func.func @transform_2(%arg0: i32, %arg1: i32) -> (i32, i32, i32) {
    %c0_i32 = arith.constant 0 : i32
    %c0_i32_0 = arith.constant 0 : i32
    return %arg0, %c0_i32, %arg1 : i32, i32, i32
  }
}

</mosaic_0001>

<llo_original>
// kernel: tpu_custom_call.1
$region0: #{tpu_custom_call.1}
  #allocation0 [shape = 'u32[]', space=smem, size = 0x4, offset = 0x4, fixed_abs, tag = 'smem constant byte address 0x4 - core index']
  #allocation1 [shape = 'u32[144,128]{1,0:T(1,128)}', space=vmem, size = 0x12000, scoped, tag = 'internal scratch']
  %s0 = inlined_call_operand.hbm [shape: f32[2,32,256], index: 0, kind: input, shape index: {}]
  %s1 = inlined_call_operand.vmem [shape: f32[64,32], index: 1, kind: input, shape index: {}]
  %s2 = inlined_call_operand.hbm [shape: f32[2,64,256], index: 2, kind: output, shape index: {}]
  %s3 = sld [smem:[#allocation0]]
  $region45: #{tpu_custom_call.1} parent=0
    _
  %s5 = ssub.s32 1, %s3
  %s6 = scalar_select 0, %s5, %s3
  $region1: #{tpu_custom_call.1} parent=0
    #allocation2 [shape = 'u8[65536]{0}', space=vmem, size = 0x10000, scoped, tag = 'input window, operand 0']
    #allocation3 [shape = 's32[2]{0}', space=sflag, size = 0x8, scoped, tag = 'scoped memory for tpu_custom_call.1']
    #allocation4 [shape = 's32[2]{0}', space=sflag, size = 0x8, scoped, tag = 'scoped memory for tpu_custom_call.1']
    #allocation5 [shape = 'u8[131072]{0}', space=vmem, size = 0x20000, scoped, tag = 'output window, operand 0']
    %7 = vsyncpa [#allocation3], 0
    %s8 = scalar_lea.sflag [#allocation3], 1
    %9 = vsyncpa %s8, 0
    %10 = vsyncpa [#allocation4], 0
    %s11 = scalar_lea.sflag [#allocation4], 1
    %12 = vsyncpa %s11, 0
    loop: start=0, step=1, limit=4
    $region2: #{tpu_custom_call.1} parent=1 // loop_pre_header
      _
    $region3: #{tpu_custom_call.1} parent=1 // loop_header
      %s14 = sphi 0, %s18
      %p15 = scmp.ge.s32.totalorder %s14, 4
      %s21 = sphi 0, %s33
      %s22 = sphi 0, %s29
      %s23 = sphi 0, %s21
      %s24 = sphi 0, %s22
      %s25 = sphi 0, %s23
      %s26 = sphi 0, %s24
      %s38 = sphi 0, %s40
      %s41 = sphi 0, %s38
      %s42 = sphi 0, %s41
      %s58 = sphi 0, %s42
      %s62 = sphi 0, %s62
      %s64 = sphi 0, %s62
      %s65 = sphi 0, %s64
      %s79 = sphi 0, %s65
      %s87 = sphi 0, %s89
      %s90 = sphi 0, %s87
      %s91 = sphi 0, %s90
      %s107 = sphi 0, %s91
    $region4: #{tpu_custom_call.1} parent=1 // loop_header_branch
      %17 = sbr.rel (%p15) target = $region8
    $region5: #{tpu_custom_call.1} parent=1 // loop_body
      %s19 = ssub.s32 %s14, 1
      %s20 = ssub.s32 %s14, 2
      %s27 = sadd.s32 1, %s22
      %p28 = scmp.ge.s32.totalorder %s27, 1
      %s29 = scalar_select %p28, 0, %s27
      %s30 = sadd.s32 1, %s21
      %s31 = scalar_select %p28, %s30, %s21
      %p32 = scmp.ge.s32.totalorder %s31, 2
      %s33 = scalar_select %p32, 0, %s31
      %s34 = ssub.s32 %s21, %s33
      %s35 = ssub.s32 %s22, %s29
      %s36 = sor.u32 %s34, %s35
      %p37 = scmp.eq.s32.totalorder %s36, 0
      %s39 = sadd.s32 %s38, 1
      %s40 = scalar_select %p37, %s38, %s39
      %p43 = pneg %p37
      %p44 = scmp.eq.s32.totalorder %s14, 1
      %p45 = por %p43, %p44
      %p46 = scmp.ne.s32.totalorder %s38, %s41
      %p47 = scmp.eq.s32.totalorder %s14, 0
      %p48 = por %p46, %p47
      %p49 = scmp.ne.s32.totalorder %s38, %s41
      %p50 = scmp.eq.s32.totalorder %s19, 1
      %p51 = por %p49, %p50
      %p52 = scmp.ne.s32.totalorder %s41, %s42
      %p53 = scmp.eq.s32.totalorder %s19, 0
      %p54 = por %p52, %p53
      %p55 = scmp.ne.s32.totalorder %s41, %s42
      %p56 = scmp.eq.s32.totalorder %s20, 1
      %p57 = por %p55, %p56
      %p59 = scmp.ne.s32.totalorder %s42, %s58
      %p60 = scmp.eq.s32.totalorder %s20, 0
      %p61 = por %p59, %p60
      %s63 = sadd.s32 %s62, 1
      %p66 = scmp.eq.s32.totalorder %s14, 1
      %p67 = scmp.ne.s32.totalorder %s62, %s64
      %p68 = scmp.eq.s32.totalorder %s14, 0
      %p69 = por %p67, %p68
      %p70 = scmp.ne.s32.totalorder %s62, %s64
      %p71 = scmp.eq.s32.totalorder %s19, 1
      %p72 = por %p70, %p71
      %p73 = scmp.ne.s32.totalorder %s64, %s65
      %p74 = scmp.eq.s32.totalorder %s19, 0
      %p75 = por %p73, %p74
      %p76 = scmp.ne.s32.totalorder %s64, %s65
      %p77 = scmp.eq.s32.totalorder %s20, 1
      %p78 = por %p76, %p77
      %p80 = scmp.ne.s32.totalorder %s65, %s79
      %p81 = scmp.eq.s32.totalorder %s20, 0
      %p82 = por %p80, %p81
      %s83 = ssub.s32 %s21, %s33
      %s84 = ssub.s32 %s22, %s29
      %s85 = sor.u32 %s83, %s84
      %p86 = scmp.eq.s32.totalorder %s85, 0
      %s88 = sadd.s32 %s87, 1
      %s89 = scalar_select %p86, %s87, %s88
      %p92 = pneg %p86
      %p93 = scmp.eq.s32.totalorder %s14, 1
      %p94 = por %p92, %p93
      %p95 = scmp.ne.s32.totalorder %s87, %s90
      %p96 = scmp.eq.s32.totalorder %s14, 0
      %p97 = por %p95, %p96
      %p98 = scmp.ne.s32.totalorder %s87, %s90
      %p99 = scmp.eq.s32.totalorder %s19, 1
      %p100 = por %p98, %p99
      %p101 = scmp.ne.s32.totalorder %s90, %s91
      %p102 = scmp.eq.s32.totalorder %s19, 0
      %p103 = por %p101, %p102
      %p104 = scmp.ne.s32.totalorder %s90, %s91
      %p105 = scmp.eq.s32.totalorder %s20, 1
      %p106 = por %p104, %p105
      %p108 = scmp.ne.s32.totalorder %s91, %s107
      %p109 = scmp.eq.s32.totalorder %s20, 0
      %p110 = por %p108, %p109
      %p111 = scmp.le.s32.totalorder 1, %s14
      %p112 = scmp.lt.s32.totalorder %s14, 3
      %p113 = pnand %p111, %p112
      %p114 = pneg %p113
      // Predicated region
      $region9: #{tpu_custom_call.1} parent=5 // pred_check
        _
      $region10: #{tpu_custom_call.1} parent=5 // pred_check_branch
        %116 = sbr.rel (%p113) target = $region12
      $region11: #{tpu_custom_call.1} parent=5 // pred_region
        %s117 = ssub.s32 %s14, 1
        // Predicated region
        $region13: #{tpu_custom_call.1} parent=11 // pred_check
          %p118 = pneg %p75
        $region14: #{tpu_custom_call.1} parent=11 // pred_check_branch
          %120 = sbr.rel (%p118) target = $region16
        $region15: #{tpu_custom_call.1} parent=11 // pred_region
          _
        $region16: #{tpu_custom_call.1} parent=11 // pred_fallthru
          _
      $region12: #{tpu_custom_call.1} parent=5 // pred_fallthru
        _
      %p121 = scmp.lt.s32.totalorder %s14, 2
      // Predicated region
      $region17: #{tpu_custom_call.1} parent=5 // pred_check
        %p122 = pneg %p121
      $region18: #{tpu_custom_call.1} parent=5 // pred_check_branch
        %124 = sbr.rel (%p122) target = $region20
      $region19: #{tpu_custom_call.1} parent=5 // pred_region
        // Predicated region
        $region21: #{tpu_custom_call.1} parent=19 // pred_check
          %p125 = pneg %p48
        $region22: #{tpu_custom_call.1} parent=19 // pred_check_branch
          %127 = sbr.rel (%p125) target = $region24
        $region23: #{tpu_custom_call.1} parent=19 // pred_region
          %s128 = sand.u32 %s38, 1
          %s129 = scalar_lea.sflag [#allocation3], %s128
          %s130 = sand.u32 %s38, 1
          %s131 = smul.addr %s130, 64
          %s132 = scalar_lea.vmem [#allocation2], %s131
          %s133 = smul.u32 2, %s22
          %s135 = ssub.s32 1024, 1024
          %136 = vsyncadd %s129, %s135
          %s137 = smul.addr %s21, 8
          %s138 = sadd.s32 %s133, %s137
          %s139 = smul.addr %s138, 128
          %s140 = scalar_lea.hbm %s0, %s139
          %s141 = sshll.u32 %s132, 4
          %s142 = int_to_ptr.vmem [resolvable:$true] %s141
          %147 = dma.hbm_to_vmem [thread:$0]  %s140, 1024, %s142, %s129, 256, 256, 16
        $region24: #{tpu_custom_call.1} parent=19 // pred_fallthru
          _
      $region20: #{tpu_custom_call.1} parent=5 // pred_fallthru
        _
      %p148 = scmp.le.s32.totalorder 1, %s14
      %p149 = scmp.lt.s32.totalorder %s14, 3
      %p150 = pnand %p148, %p149
      %p151 = pneg %p150
      // Predicated region
      $region25: #{tpu_custom_call.1} parent=5 // pred_check
        _
      $region26: #{tpu_custom_call.1} parent=5 // pred_check_branch
        %153 = sbr.rel (%p150) target = $region28
      $region27: #{tpu_custom_call.1} parent=5 // pred_region
        %s154 = ssub.s32 %s14, 1
        %s155 = sand.u32 %s41, 1
        %s156 = scalar_lea.sflag [#allocation3], %s155
        %s157 = sand.u32 %s41, 1
        %s158 = smul.addr %s157, 64
        %s159 = scalar_lea.vmem [#allocation2], %s158
        // Predicated region
        $region29: #{tpu_custom_call.1} parent=27 // pred_check
          %p160 = pneg %p54
        $region30: #{tpu_custom_call.1} parent=27 // pred_check_branch
          %162 = sbr.rel (%p160) target = $region32
        $region31: #{tpu_custom_call.1} parent=27 // pred_region
          %163 = dma.done %s156, 1024
        $region32: #{tpu_custom_call.1} parent=27 // pred_fallthru
          _
        %s164 = sand.u32 %s41, 1
        %s165 = scalar_lea.sflag [#allocation3], %s164
        %s166 = sand.u32 %s41, 1
        %s167 = smul.addr %s166, 64
        %s168 = scalar_lea.vmem [#allocation2], %s167
        %p169 = pneg %p54
        %p170 = pneg %p51
        %p171 = pneg %p75
        %p172 = pneg %p72
        %p173 = pneg %p103
        %p174 = pneg %p100
        %s175 = sand.u32 %s90, 1
        %s176 = scalar_lea.sflag [#allocation4], %s175
        %s177 = sand.u32 %s90, 1
        %s178 = smul.addr %s177, 128
        %s179 = scalar_lea.vmem [#allocation5], %s178
        %s180 = smul.u32 2, %s24
        %s181 = smul.u32 2, %s24
        %v182 = vld [vmem:[%s1] sm:$0xff]
        %v183 = vld [vmem:[%s1 + $0x8] sm:$0xff]
        %v184 = vld [vmem:[%s1 + $0x10] sm:$0xff]
        %v185 = vld [vmem:[%s1 + $0x18] sm:$0xff]
        %v186 = vld [vmem:[%s1 + $0x20] sm:$0xff]
        %v187 = vld [vmem:[%s1 + $0x28] sm:$0xff]
        %v188 = vld [vmem:[%s1 + $0x30] sm:$0xff]
        %v189 = vld [vmem:[%s1 + $0x38] sm:$0xff]
        %v190 = vld [vmem:[%s159] sm:$0xff]
        %v191 = vld [vmem:[%s159 + $0x8] sm:$0xff]
        %v192 = vld [vmem:[%s159 + $0x10] sm:$0xff]
        %v193 = vld [vmem:[%s159 + $0x18] sm:$0xff]
        %v194 = vld [vmem:[%s159 + $0x20] sm:$0xff]
        %v195 = vld [vmem:[%s159 + $0x28] sm:$0xff]
        %v196 = vld [vmem:[%s159 + $0x30] sm:$0xff]
        %v197 = vld [vmem:[%s159 + $0x38] sm:$0xff]
        %vm198 = vcmask 261120
        %v200 = vsel %vm198, %v182, 0
        %v203 = vsel %vm198, %v183, 0
        %v206 = vsel %vm198, %v184, 0
        %v209 = vsel %vm198, %v185, 0
        %v212 = vsel %vm198, %v186, 0
        %v215 = vsel %vm198, %v187, 0
        %v218 = vsel %vm198, %v188, 0
        %v221 = vsel %vm198, %v189, 0
        %223 = vmatprep.subr.mxu0 0.0
        %224 = vmatpush1.msra.mxu0 0.0
        %225 = vmatprep.subr.mxu0 0.0
        %226 = vmatpush1.msra.mxu0 0.0
        %227 = vmatprep.subr.mxu0 0.0
        %228 = vmatpush1.msra.mxu0 0.0
        %229 = vmatprep.subr.mxu0 0.0
        %230 = vmatpush1.msra.mxu0 0.0
        %231 = vmatprep.subr.mxu0 0.0
        %232 = vmatpush1.msra.mxu0 0.0
        %233 = vmatprep.subr.mxu0 0.0
        %234 = vmatpush1.msra.mxu0 0.0
        %235 = vmatprep.subr.mxu0 0.0
        %236 = vmatpush1.msra.mxu0 0.0
        %237 = vmatprep.subr.mxu0 0.0
        %238 = vmatpush1.msra.mxu0 0.0
        %239 = vmatprep.subr.mxu0 0.0
        %240 = vmatpush1.msra.mxu0 0.0
        %241 = vmatprep.subr.mxu0 0.0
        %242 = vmatpush1.msra.mxu0 0.0
        %243 = vmatprep.subr.mxu0 0.0
        %244 = vmatpush1.msra.mxu0 0.0
        %245 = vmatprep.subr.mxu0 0.0
        %246 = vmatpush1.msra.mxu0 0.0
        %247 = vmatprep.subr.mxu0 %v197
        %248 = vmatpush1.msra.mxu0 %v196
        %249 = vmatprep.subr.mxu0 %v195
        %250 = vmatpush1.msra.mxu0 %v194
        %251 = vmatprep.subr.mxu0 %v193
        %252 = vmatpush1.msra.mxu0 %v192
        %253 = vmatprep.subr.mxu0 %v191
        %254 = vmatpush1.msra.mxu0 %v190
        %255 = vmatprep.subr.mxu0 0.0
        %256 = vmatpush2.msra.mxu0 0.0
        %257 = vmatprep.subr.mxu0 0.0
        %258 = vmatpush2.msra.mxu0 0.0
        %259 = vmatprep.subr.mxu0 0.0
        %260 = vmatpush2.msra.mxu0 0.0
        %261 = vmatprep.subr.mxu0 0.0
        %262 = vmatpush2.msra.mxu0 0.0
        %263 = vmatprep.subr.mxu0 0.0
        %264 = vmatpush2.msra.mxu0 0.0
        %265 = vmatprep.subr.mxu0 0.0
        %266 = vmatpush2.msra.mxu0 0.0
        %267 = vmatprep.subr.mxu0 0.0
        %268 = vmatpush2.msra.mxu0 0.0
        %269 = vmatprep.subr.mxu0 0.0
        %270 = vmatpush2.msra.mxu0 0.0
        %271 = vmatprep.subr.mxu0 0.0
        %272 = vmatpush2.msra.mxu0 0.0
        %273 = vmatprep.subr.mxu0 0.0
        %274 = vmatpush2.msra.mxu0 0.0
        %275 = vmatprep.subr.mxu0 0.0
        %276 = vmatpush2.msra.mxu0 0.0
        %277 = vmatprep.subr.mxu0 0.0
        %278 = vmatpush2.msra.mxu0 0.0
        %279 = vmatprep.subr.mxu0 0.0
        %280 = vmatpush2.msra.mxu0 0.0
        %281 = vmatprep.subr.mxu0 0.0
        %282 = vmatpush2.msra.mxu0 0.0
        %283 = vmatprep.subr.mxu0 0.0
        %284 = vmatpush2.msra.mxu0 0.0
        %285 = vmatprep.subr.mxu0 0.0
        %286 = vmatpush2.msra.mxu0 0.0
        %287 = vmatprep.mubr.f32.mxu0 0.0
        %288 = vmatmul.mubr.f32.gmra.mxu0 %v200
        %v289 = vpop.f32.mrf.mxu0
        %v290 = vadd.f32 0.0, %v289
        %v291 = vpop.f32.mrf.mxu0
        %v292 = vadd.f32 0.0, %v291
        %293 = vmatprep.mubr.f32.mxu0 0.0
        %294 = vmatmul.mubr.f32.gmra.mxu0 %v203
        %v295 = vpop.f32.mrf.mxu0
        %v296 = vadd.f32 0.0, %v295
        %v297 = vpop.f32.mrf.mxu0
        %v298 = vadd.f32 0.0, %v297
        %299 = vmatprep.mubr.f32.mxu0 0.0
        %300 = vmatmul.mubr.f32.gmra.mxu0 %v206
        %v301 = vpop.f32.mrf.mxu0
        %v302 = vadd.f32 0.0, %v301
        %v303 = vpop.f32.mrf.mxu0
        %v304 = vadd.f32 0.0, %v303
        %305 = vmatprep.mubr.f32.mxu0 0.0
        %306 = vmatmul.mubr.f32.gmra.mxu0 %v209
        %v307 = vpop.f32.mrf.mxu0
        %v308 = vadd.f32 0.0, %v307
        %v309 = vpop.f32.mrf.mxu0
        %v310 = vadd.f32 0.0, %v309
        %311 = vmatprep.mubr.f32.mxu0 0.0
        %312 = vmatmul.mubr.f32.gmra.mxu0 %v212
        %v313 = vpop.f32.mrf.mxu0
        %v314 = vadd.f32 0.0, %v313
        %v315 = vpop.f32.mrf.mxu0
        %v316 = vadd.f32 0.0, %v315
        %317 = vmatprep.mubr.f32.mxu0 0.0
        %318 = vmatmul.mubr.f32.gmra.mxu0 %v215
        %v319 = vpop.f32.mrf.mxu0
        %v320 = vadd.f32 0.0, %v319
        %v321 = vpop.f32.mrf.mxu0
        %v322 = vadd.f32 0.0, %v321
        %323 = vmatprep.mubr.f32.mxu0 0.0
        %324 = vmatmul.mubr.f32.gmra.mxu0 %v218
        %v325 = vpop.f32.mrf.mxu0
        %v326 = vadd.f32 0.0, %v325
        %v327 = vpop.f32.mrf.mxu0
        %v328 = vadd.f32 0.0, %v327
        %329 = vmatprep.mubr.f32.mxu0 0.0
        %330 = vmatmul.mubr.f32.gmra.mxu0 %v221
        %v331 = vpop.f32.mrf.mxu0
        %v332 = vadd.f32 0.0, %v331
        %v333 = vpop.f32.mrf.mxu0
        %v334 = vadd.f32 0.0, %v333
        %335 = vdwg.mxu0
        %336 = vst [vmem:[%s179] sm:$0xff] %v290
        %337 = vst [vmem:[%s179 + $0x8] sm:$0xff] %v292
        %338 = vst [vmem:[%s179 + $0x10] sm:$0xff] %v296
        %339 = vst [vmem:[%s179 + $0x18] sm:$0xff] %v298
        %340 = vst [vmem:[%s179 + $0x20] sm:$0xff] %v302
        %341 = vst [vmem:[%s179 + $0x28] sm:$0xff] %v304
        %342 = vst [vmem:[%s179 + $0x30] sm:$0xff] %v308
        %343 = vst [vmem:[%s179 + $0x38] sm:$0xff] %v310
        %344 = vst [vmem:[%s179 + $0x40] sm:$0xff] %v314
        %345 = vst [vmem:[%s179 + $0x48] sm:$0xff] %v316
        %346 = vst [vmem:[%s179 + $0x50] sm:$0xff] %v320
        %347 = vst [vmem:[%s179 + $0x58] sm:$0xff] %v322
        %348 = vst [vmem:[%s179 + $0x60] sm:$0xff] %v326
        %349 = vst [vmem:[%s179 + $0x68] sm:$0xff] %v328
        %350 = vst [vmem:[%s179 + $0x70] sm:$0xff] %v332
        %351 = vst [vmem:[%s179 + $0x78] sm:$0xff] %v334
        %s352 = sand.u32 %s90, 1
        %s353 = scalar_lea.sflag [#allocation4], %s352
        %s354 = sand.u32 %s90, 1
        %s355 = smul.addr %s354, 128
        %s356 = scalar_lea.vmem [#allocation5], %s355
        // Predicated region
        $region33: #{tpu_custom_call.1} parent=27 // pred_check
          %p357 = pneg %p100
        $region34: #{tpu_custom_call.1} parent=27 // pred_check_branch
          %359 = sbr.rel (%p357) target = $region36
        $region35: #{tpu_custom_call.1} parent=27 // pred_region
          %s360 = smul.u32 2, %s24
          %s362 = ssub.s32 2048, 2048
          %363 = vsyncadd %s353, %s362
          %s364 = smul.addr %s23, 16
          %s365 = sadd.s32 %s360, %s364
          %s366 = smul.addr %s365, 128
          %s367 = scalar_lea.hbm %s2, %s366
          %s368 = sshll.u32 %s356, 4
          %s369 = int_to_ptr.vmem [resolvable:$true] %s368
          %374 = dma.vmem_to_hbm [thread:$0]  %s369, 2048, %s367, %s353, 256, 256, 16
        $region36: #{tpu_custom_call.1} parent=27 // pred_fallthru
          _
      $region28: #{tpu_custom_call.1} parent=5 // pred_fallthru
        _
      %p375 = scmp.le.s32.totalorder 2, %s14
      // Predicated region
      $region37: #{tpu_custom_call.1} parent=5 // pred_check
        %p376 = pneg %p375
      $region38: #{tpu_custom_call.1} parent=5 // pred_check_branch
        %378 = sbr.rel (%p376) target = $region40
      $region39: #{tpu_custom_call.1} parent=5 // pred_region
        %s379 = ssub.s32 %s14, 2
        // Predicated region
        $region41: #{tpu_custom_call.1} parent=39 // pred_check
          %p380 = pneg %p106
        $region42: #{tpu_custom_call.1} parent=39 // pred_check_branch
          %382 = sbr.rel (%p380) target = $region44
        $region43: #{tpu_custom_call.1} parent=39 // pred_region
          %s383 = sand.u32 %s91, 1
          %s384 = scalar_lea.sflag [#allocation4], %s383
          %s385 = sand.u32 %s91, 1
          %s386 = smul.addr %s385, 128
          %s387 = scalar_lea.vmem [#allocation5], %s386
          %388 = dma.done %s384, 2048
        $region44: #{tpu_custom_call.1} parent=39 // pred_fallthru
          _
      $region40: #{tpu_custom_call.1} parent=5 // pred_fallthru
        _
    $region6: #{tpu_custom_call.1} parent=1 // loop_footer
      %s18 = sadd.s32 1, %s14
    $region7: #{tpu_custom_call.1} parent=1 // loop_footer_branch
      %13 = sbr.rel target = $region3
    $region8: #{tpu_custom_call.1} parent=1 // loop_exit
      _
    %389 = vsyncpa [#allocation3], 1
    %s390 = scalar_lea.sflag [#allocation3], 1
    %391 = vsyncpa %s390, 1
    %392 = vsyncpa [#allocation4], 1
    %s393 = scalar_lea.sflag [#allocation4], 1
    %394 = vsyncpa %s393, 1

</llo_original>
